<compile_context>
chip_gen: v5e
topology: v5e:2x2
jax: 0.10.0
libtpu: 0.0.40
codegen_flags: <defaults>
</compile_context>

<pallas_src>
import functools

import jax
import jax.numpy as jnp
from jax import lax
from jax.experimental import pallas as pl
from jax.experimental.pallas import tpu as pltpu


# ----------------------------------------------------------------------------
# Kernel 1: GraphAttentionEmbedder forward (whole batch in one kernel call)
#   central (B, D), kv_flat (B*2N, D) -> graph_emb (B, D)
# ----------------------------------------------------------------------------
def graph_attn_kernel(c_ref, kv_ref, wq_ref, wkv_ref, wo_ref, o_ref, *, num_kv):
    B, D = c_ref.shape

    c = c_ref[...]                                                   # (B, D) f32
    q = jnp.dot(c.astype(jnp.bfloat16), wq_ref[...],
                preferred_element_type=jnp.float32)                  # (B, D)

    kvp = jnp.dot(kv_ref[...].astype(jnp.bfloat16), wkv_ref[...],
                  preferred_element_type=jnp.float32)                # (B*K, 2D)
    k = kvp[:, :D]                                                   # (B*K, D)
    v = kvp[:, D:]                                                   # (B*K, D)

    # Scores for all batch elements at once; keep rank-2 and mask the
    # cross-sentence blocks (block-diagonal attention).  B*K is tiny.
    scale = 1.0 / jnp.sqrt(jnp.float32(D))
    s = lax.dot_general(q.astype(jnp.bfloat16), k.astype(jnp.bfloat16),
                        (((1,), (1,)), ((), ())),
                        preferred_element_type=jnp.float32) * scale  # (B, B*K)
    row = lax.broadcasted_iota(jnp.int32, s.shape, 0)
    col = lax.broadcasted_iota(jnp.int32, s.shape, 1)
    same_sentence = (col >= row * num_kv) & (col < (row + 1) * num_kv)
    s = jnp.where(same_sentence, s, jnp.float32(-1e30))

    m = jnp.max(s, axis=-1, keepdims=True)
    e = jnp.exp(s - m)
    p = e * pl.reciprocal(jnp.sum(e, axis=-1, keepdims=True), approx=True)

    ctx = jnp.dot(p.astype(jnp.bfloat16), v.astype(jnp.bfloat16),
                  preferred_element_type=jnp.float32)                # (B, D)
    o_ref[...] = jnp.dot(ctx.astype(jnp.bfloat16), wo_ref[...],
                         preferred_element_type=jnp.float32).astype(o_ref.dtype)


def graph_attention_embed(central, nodes, edges, wq, wkv, wo):
    B, N, D = nodes.shape
    # Wrapper-side concat + flatten (free layout plumbing, halves input DMAs).
    kv_flat = jnp.concatenate([nodes, edges], axis=1).reshape(B * 2 * N, D)
    kernel = functools.partial(graph_attn_kernel, num_kv=2 * N)
    return pl.pallas_call(
        kernel,
        out_shape=jax.ShapeDtypeStruct((B, D), jnp.float32),
    )(central, kv_flat, wq, wkv, wo)


# ----------------------------------------------------------------------------
# Kernel 2: synthetic LLM "predict" hot path, collapsed via causality.
#   x (B, L, D) full sequences -> logits at the last n_target real positions,
#   i.e. (B, n_target, V).  One masked self-attention + ReLU-MLP block
#   (residual), then the LM head tiled along V (grid axis j).
# ----------------------------------------------------------------------------
def llm_tail_kernel(x_ref, wq_ref, wkv_ref, wo_ref, w1_ref, w2_ref, wh_ref,
                    o_ref, h_ref, *, seq_real, n_queries):
    L, D = x_ref.shape[1], x_ref.shape[2]
    T = n_queries
    q0 = seq_real - T            # global position of the first query row

    # Hidden state is V-tile independent: compute once per sentence (j == 0),
    # keep it in VMEM scratch and reuse it for every LM-head V tile.
    @pl.when(pl.program_id(1) == 0)
    def _compute_hidden():
        x = x_ref[0]                                                  # (L, D) f32

        kv = jnp.dot(x.astype(jnp.bfloat16), wkv_ref[...],
                     preferred_element_type=jnp.float32)              # (L, 2D)
        k = kv[:, :D]
        v = kv[:, D:]

        xq = x[q0:q0 + T, :]                                          # (T, D)
        q = jnp.dot(xq.astype(jnp.bfloat16), wq_ref[...],
                    preferred_element_type=jnp.float32)               # (T, D)

        scale = 1.0 / jnp.sqrt(jnp.float32(D))
        s = lax.dot_general(q.astype(jnp.bfloat16), k.astype(jnp.bfloat16),
                            (((1,), (1,)), ((), ())),
                            preferred_element_type=jnp.float32) * scale   # (T, L)

        # Causal mask; the right-padded key columns (>= seq_real) are always
        # beyond every query position, so no extra padding mask is needed.
        qpos = q0 + lax.broadcasted_iota(jnp.int32, (T, L), 0)
        kpos = lax.broadcasted_iota(jnp.int32, (T, L), 1)
        s = jnp.where(kpos <= qpos, s, jnp.float32(-1e30))

        m = jnp.max(s, axis=-1, keepdims=True)
        e = jnp.exp(s - m)
        p = e * pl.reciprocal(jnp.sum(e, axis=-1, keepdims=True), approx=True)

        attn = jnp.dot(p.astype(jnp.bfloat16), v.astype(jnp.bfloat16),
                       preferred_element_type=jnp.float32)            # (T, D)
        h = xq + jnp.dot(attn.astype(jnp.bfloat16), wo_ref[...],
                         preferred_element_type=jnp.float32)

        mlp = jnp.maximum(
            jnp.dot(h.astype(jnp.bfloat16), w1_ref[...],
                    preferred_element_type=jnp.float32), 0.0)
        h = h + jnp.dot(mlp.astype(jnp.bfloat16), w2_ref[...],
                        preferred_element_type=jnp.float32)
        h_ref[...] = h

    # LM head for this V tile (lane-dense (T, TV) output block).
    logits = jnp.dot(h_ref[...].astype(jnp.bfloat16), wh_ref[...],
                     preferred_element_type=jnp.float32)              # (T, TV)
    o_ref[...] = logits[None].astype(o_ref.dtype)


def llm_predict_tail_logits(x, wq, wkv, wo, w1, w2, wh, *, n_target, seq_real,
                            tv=128):
    B, L, D = x.shape
    V = wh.shape[1]
    assert V % tv == 0
    nv = V // tv

    kernel = functools.partial(llm_tail_kernel, seq_real=seq_real,
                               n_queries=n_target)

    def wspec(w):
        return pl.BlockSpec(w.shape, lambda b, j: (0, 0))

    out = pl.pallas_call(
        kernel,
        out_shape=jax.ShapeDtypeStruct((B, n_target, V), jnp.float32),
        grid=(B, nv),
        in_specs=[
            pl.BlockSpec((1, L, D), lambda b, j: (b, 0, 0)),
            wspec(wq), wspec(wkv), wspec(wo), wspec(w1), wspec(w2),
            pl.BlockSpec((D, tv), lambda b, j: (0, j)),
        ],
        out_specs=pl.BlockSpec((1, n_target, tv), lambda b, j: (b, 0, j)),
        scratch_shapes=[pltpu.VMEM((n_target, D), jnp.float32)],
        compiler_params=pltpu.CompilerParams(
            dimension_semantics=("parallel", "arbitrary")),
    )(x, wq, wkv, wo, w1, w2, wh)
    return out.reshape(B * n_target, V)


# ----------------------------------------------------------------------------
# SentenceTrainer.forward (vectorized glue in plain JAX around the kernels)
# ----------------------------------------------------------------------------
def sentence_trainer_forward(start_ids, end_ids, target_ids,
                             central_node_embedding, node_embeddings,
                             edge_embeddings, params):
    B, n_target = target_ids.shape
    E = params["embed_table"]

    # 1) graph embedder (Pallas kernel)
    graph_emb = graph_attention_embed(
        central_node_embedding, node_embeddings, edge_embeddings,
        params["g_wq"], params["g_wkv"], params["g_wo"])              # (B, D)

    # 2) one full sequence per sentence: [start, graph_emb, end, targets[:-1]]
    #    The n_target left-padded rows of the original module are recovered by
    #    reading logits at the last n_target positions (causal attention makes
    #    them identical to each row's logits[:, -1, :]).
    start_e = E[start_ids]                                            # (B, ns, D)
    end_e = E[end_ids]                                                # (B, ne, D)
    tgt_e = E[target_ids[:, :n_target - 1]]                           # (B, nt-1, D)
    seq = jnp.concatenate([start_e, graph_emb[:, None, :], end_e, tgt_e], axis=1)
    seq_real = seq.shape[1]
    L = ((seq_real + 7) // 8) * 8        # sublane-friendly length (right pad)
    x = jnp.pad(seq, ((0, 0), (0, L - seq_real), (0, 0)))

    # 3) llm.predict -> logits at the n_target query positions (Pallas kernel)
    return llm_predict_tail_logits(
        x, params["l_wq"], params["l_wkv"], params["l_wo"],
        params["l_w1"], params["l_w2"], params["l_wh"],
        n_target=n_target, seq_real=seq_real)                         # (B*nt, V)


# ----------------------------------------------------------------------------
# Deterministic parameter / input construction
# ----------------------------------------------------------------------------
def make_params(key, D, V):
    ks = jax.random.split(key, 10)

    def w(k, shape):  # bf16 MXU operands; activations / accumulation stay f32
        return (0.02 * jax.random.normal(k, shape, jnp.float32)).astype(jnp.bfloat16)

    return {
        "embed_table": 0.02 * jax.random.normal(ks[0], (V, D), jnp.float32),
        "g_wq": w(ks[1], (D, D)),
        "g_wkv": w(ks[2], (D, 2 * D)),
        "g_wo": w(ks[3], (D, D)),
        "l_wq": w(ks[4], (D, D)),
        "l_wkv": w(ks[5], (D, 2 * D)),
        "l_wo": w(ks[6], (D, D)),
        "l_w1": w(ks[7], (D, 4 * D)),
        "l_w2": w(ks[8], (4 * D, D)),
        "l_wh": w(ks[9], (D, V)),
    }


if __name__ == "__main__":
    B, N, D, V = 2, 8, 128, 256
    n_start, n_end, n_target = 4, 3, 4

    key = jax.random.PRNGKey(0)
    k_in, k_par, k_tok = jax.random.split(key, 3)
    k_c, k_n, k_e = jax.random.split(k_in, 3)

    central_node_embedding = jax.random.normal(k_c, (B, D), jnp.float32)
    node_embeddings = jax.random.normal(k_n, (B, N, D), jnp.float32)
    edge_embeddings = jax.random.normal(k_e, (B, N, D), jnp.float32)

    k_s, k_e2, k_t = jax.random.split(k_tok, 3)
    start_ids = jax.random.randint(k_s, (B, n_start), 0, V)
    end_ids = jax.random.randint(k_e2, (B, n_end), 0, V)
    target_ids = jax.random.randint(k_t, (B, n_target), 0, V)

    params = make_params(k_par, D, V)

    logits = sentence_trainer_forward(
        start_ids, end_ids, target_ids,
        central_node_embedding, node_embeddings, edge_embeddings, params)
    logits = jax.block_until_ready(logits)

    assert logits.shape == (B * n_target, V), logits.shape
    assert bool(jnp.all(jnp.isfinite(logits)))
    print("KERNEL_OK")
</pallas_src>

<mosaic_0001>
module attributes {stable_mosaic.version = 11 : i64} {
  func.func @graph_attn_kernel(%arg0: memref<2x128xf32, #tpu.memory_space<vmem>>, %arg1: memref<32x128xf32, #tpu.memory_space<vmem>>, %arg2: memref<128x128xbf16, #tpu.memory_space<vmem>>, %arg3: memref<128x256xbf16, #tpu.memory_space<vmem>>, %arg4: memref<128x128xbf16, #tpu.memory_space<vmem>>, %arg5: memref<2x128xf32, #tpu.memory_space<vmem>>) attributes {dimension_semantics = [], scalar_prefetch = 0 : i64, scratch_operands = 0 : i64, tpu.core_type = #tpu.core_type<tc>} {
    %c0 = arith.constant 0 : index
    %c0_0 = arith.constant 0 : index
    %0 = vector.load %arg0[%c0, %c0_0] : memref<2x128xf32, #tpu.memory_space<vmem>>, vector<2x128xf32>
    %1 = arith.truncf %0 : vector<2x128xf32> to vector<2x128xbf16>
    %c0_1 = arith.constant 0 : index
    %c0_2 = arith.constant 0 : index
    %2 = vector.load %arg2[%c0_1, %c0_2] : memref<128x128xbf16, #tpu.memory_space<vmem>>, vector<128x128xbf16>
    %cst = arith.constant dense<0.000000e+00> : vector<2x128xf32>
    %3 = tpu.matmul %1, %2, %cst {dimension_numbers = #tpu.dot_dimension_numbers<[1], [0], [0], [1], [0, 0, 1, 1], [], []>} : vector<2x128xbf16>, vector<128x128xbf16>, vector<2x128xf32> -> vector<2x128xf32>
    %c0_3 = arith.constant 0 : index
    %c0_4 = arith.constant 0 : index
    %4 = vector.load %arg1[%c0_3, %c0_4] : memref<32x128xf32, #tpu.memory_space<vmem>>, vector<32x128xf32>
    %5 = arith.truncf %4 : vector<32x128xf32> to vector<32x128xbf16>
    %c0_5 = arith.constant 0 : index
    %c0_6 = arith.constant 0 : index
    %6 = vector.load %arg3[%c0_5, %c0_6] : memref<128x256xbf16, #tpu.memory_space<vmem>>, vector<128x256xbf16>
    %cst_7 = arith.constant dense<0.000000e+00> : vector<32x256xf32>
    %7 = tpu.matmul %5, %6, %cst_7 {dimension_numbers = #tpu.dot_dimension_numbers<[1], [0], [0], [1], [0, 0, 1, 1], [], []>} : vector<32x128xbf16>, vector<128x256xbf16>, vector<32x256xf32> -> vector<32x256xf32>
    %8 = vector.extract_strided_slice %7 {offsets = [0, 0], sizes = [32, 128], strides = [1, 1]} : vector<32x256xf32> to vector<32x128xf32>
    %9 = vector.extract_strided_slice %7 {offsets = [0, 128], sizes = [32, 128], strides = [1, 1]} : vector<32x256xf32> to vector<32x128xf32>
    %cst_8 = arith.constant 1.280000e+02 : f32
    %10 = math.sqrt %cst_8 : f32
    %cst_9 = arith.constant 1.000000e+00 : f32
    %11 = arith.divf %cst_9, %10 : f32
    %12 = arith.truncf %3 : vector<2x128xf32> to vector<2x128xbf16>
    %13 = arith.truncf %8 : vector<32x128xf32> to vector<32x128xbf16>
    %cst_10 = arith.constant dense<0.000000e+00> : vector<2x32xf32>
    %14 = tpu.matmul %12, %13, %cst_10 {dimension_numbers = #tpu.dot_dimension_numbers<[1], [1], [0], [0], [0, 0, 1, 0], [], []>} : vector<2x128xbf16>, vector<32x128xbf16>, vector<2x32xf32> -> vector<2x32xf32>
    %15 = vector.broadcast %11 : f32 to vector<2x32xf32>
    %16 = arith.mulf %14, %15 : vector<2x32xf32>
    %17 = tpu.iota {dimensions = array<i32: 0>} : vector<2x32xi32>
    %18 = tpu.iota {dimensions = array<i32: 1>} : vector<2x32xi32>
    %c16_i32 = arith.constant 16 : i32
    %19 = vector.broadcast %c16_i32 : i32 to vector<2x32xi32>
    %20 = arith.muli %17, %19 : vector<2x32xi32>
    %21 = arith.cmpi sge, %18, %20 : vector<2x32xi32>
    %c1_i32 = arith.constant 1 : i32
    %22 = vector.broadcast %c1_i32 : i32 to vector<2x32xi32>
    %23 = arith.addi %17, %22 : vector<2x32xi32>
    %c16_i32_11 = arith.constant 16 : i32
    %24 = vector.broadcast %c16_i32_11 : i32 to vector<2x32xi32>
    %25 = arith.muli %23, %24 : vector<2x32xi32>
    %26 = arith.cmpi slt, %18, %25 : vector<2x32xi32>
    %27 = arith.andi %21, %26 : vector<2x32xi1>
    %cst_12 = arith.constant -1.000000e+30 : f32
    %28 = vector.broadcast %cst_12 : f32 to vector<2x32xf32>
    %29 = arith.select %27, %16, %28 : vector<2x32xi1>, vector<2x32xf32>
    %cst_13 = arith.constant dense<0xFF800000> : vector<2xf32>
    %30 = vector.multi_reduction <maximumf>, %29, %cst_13 [1] : vector<2x32xf32> to vector<2xf32>
    %31 = vector.shape_cast %30 : vector<2xf32> to vector<2x1xf32>
    %32 = vector.broadcast %31 : vector<2x1xf32> to vector<2x32xf32>
    %33 = arith.subf %29, %32 : vector<2x32xf32>
    %34 = math.exp %33 : vector<2x32xf32>
    %cst_14 = arith.constant dense<0.000000e+00> : vector<2xf32>
    %35 = vector.multi_reduction <add>, %34, %cst_14 [1] : vector<2x32xf32> to vector<2xf32>
    %36 = vector.shape_cast %35 : vector<2xf32> to vector<2x1xf32>
    %37 = tpu.reciprocal %36 {approx = true} : vector<2x1xf32> -> vector<2x1xf32>
    %38 = vector.broadcast %37 : vector<2x1xf32> to vector<2x32xf32>
    %39 = arith.mulf %34, %38 : vector<2x32xf32>
    %40 = arith.truncf %39 : vector<2x32xf32> to vector<2x32xbf16>
    %41 = arith.truncf %9 : vector<32x128xf32> to vector<32x128xbf16>
    %cst_15 = arith.constant dense<0.000000e+00> : vector<2x128xf32>
    %42 = tpu.matmul %40, %41, %cst_15 {dimension_numbers = #tpu.dot_dimension_numbers<[1], [0], [0], [1], [0, 0, 1, 1], [], []>} : vector<2x32xbf16>, vector<32x128xbf16>, vector<2x128xf32> -> vector<2x128xf32>
    %43 = arith.truncf %42 : vector<2x128xf32> to vector<2x128xbf16>
    %c0_16 = arith.constant 0 : index
    %c0_17 = arith.constant 0 : index
    %44 = vector.load %arg4[%c0_16, %c0_17] : memref<128x128xbf16, #tpu.memory_space<vmem>>, vector<128x128xbf16>
    %cst_18 = arith.constant dense<0.000000e+00> : vector<2x128xf32>
    %45 = tpu.matmul %43, %44, %cst_18 {dimension_numbers = #tpu.dot_dimension_numbers<[1], [0], [0], [1], [0, 0, 1, 1], [], []>} : vector<2x128xbf16>, vector<128x128xbf16>, vector<2x128xf32> -> vector<2x128xf32>
    %c0_19 = arith.constant 0 : index
    %c0_20 = arith.constant 0 : index
    %46 = vector.load %arg5[%c0_19, %c0_20] : memref<2x128xf32, #tpu.memory_space<vmem>>, vector<2x128xf32>
    tpu.vector_store %arg5[%c0_19, %c0_20], %45 {strides = array<i32>} : memref<2x128xf32, #tpu.memory_space<vmem>>, vector<2x128xf32>,
    return
  }
}

</mosaic_0001>

<llo_original>
// kernel: tpu_custom_call.1
$region0: #{tpu_custom_call.1}
  #allocation0 [shape = 'u32[]', space=smem, size = 0x4, offset = 0x4, fixed_abs, tag = 'smem constant byte address 0x4 - core index']
  #allocation1 [shape = 'u32[72,128]{1,0:T(1,128)}', space=vmem, size = 0x9000, scoped, tag = 'internal scratch']
  %s0 = inlined_call_operand.hbm [shape: f32[2,128], index: 0, kind: input, shape index: {}]
  %s1 = inlined_call_operand.hbm [shape: f32[32,128], index: 1, kind: input, shape index: {}]
  %s2 = inlined_call_operand.hbm [shape: bf16[128,128], index: 2, kind: input, shape index: {}]
  %s3 = inlined_call_operand.hbm [shape: bf16[128,256], index: 3, kind: input, shape index: {}]
  %s4 = inlined_call_operand.hbm [shape: bf16[128,128], index: 4, kind: input, shape index: {}]
  %s5 = inlined_call_operand.hbm [shape: f32[2,128], index: 5, kind: output, shape index: {}]
  %s6 = sld [smem:[#allocation0]]
  $region50: #{tpu_custom_call.1} parent=0
    _
  %s8 = ssub.s32 1, %s6
  %s9 = scalar_select 0, %s8, %s6
  $region1: #{tpu_custom_call.1} parent=0
    #allocation2 [shape = 'u8[1024]{0}', space=vmem, size = 0x400, scoped, tag = 'input window, operand 0, single buffered']
    #allocation3 [shape = 's32[1]{0}', space=sflag, size = 0x4, scoped, tag = 'scoped memory for tpu_custom_call.1']
    #allocation4 [shape = 's32[1]{0}', space=sflag, size = 0x4, scoped, tag = 'scoped memory for tpu_custom_call.1']
    #allocation5 [shape = 'u8[16384]{0}', space=vmem, size = 0x4000, scoped, tag = 'input window, operand 1, single buffered']
    #allocation6 [shape = 's32[1]{0}', space=sflag, size = 0x4, scoped, tag = 'scoped memory for tpu_custom_call.1']
    #allocation7 [shape = 'u8[32768]{0}', space=vmem, size = 0x8000, scoped, tag = 'input window, operand 2, single buffered']
    #allocation8 [shape = 'u8[65536]{0}', space=vmem, size = 0x10000, scoped, tag = 'input window, operand 3, single buffered']
    #allocation9 [shape = 's32[1]{0}', space=sflag, size = 0x4, scoped, tag = 'scoped memory for tpu_custom_call.1']
    #allocation10 [shape = 'u8[32768]{0}', space=vmem, size = 0x8000, scoped, tag = 'input window, operand 4, single buffered']
    #allocation11 [shape = 'u8[1024]{0}', space=vmem, size = 0x400, scoped, tag = 'output window, operand 0, single buffered']
    %10 = vsyncpa [#allocation3], 0
    %11 = vsyncpa [#allocation6], 0
    %12 = vsyncpa [#allocation9], 0
    %13 = vsyncpa [#allocation4], 0
    // Predicated region
    $region2: #{tpu_custom_call.1} parent=1 // pred_check
      _
    $region3: #{tpu_custom_call.1} parent=1 // pred_check_branch
      %15 = sbr.rel (0) target = $region5
    $region4: #{tpu_custom_call.1} parent=1 // pred_region
      %17 = vsyncadd [#allocation3], 0
      %s19 = sshll.u32 %s0, 4
      %s20 = int_to_ptr.hbm [resolvable:$true] %s19
      %s21 = sshll.u32 [#allocation2], 4
      %s22 = int_to_ptr.vmem [resolvable:$true] %s21
      %24 = dma.hbm_to_vmem [thread:$0]  %s20, 32, %s22, [#allocation3]
    $region5: #{tpu_custom_call.1} parent=1 // pred_fallthru
      _
    // Predicated region
    $region6: #{tpu_custom_call.1} parent=1 // pred_check
      _
    $region7: #{tpu_custom_call.1} parent=1 // pred_check_branch
      %26 = sbr.rel (0) target = $region9
    $region8: #{tpu_custom_call.1} parent=1 // pred_region
      %28 = vsyncadd [#allocation6], 0
      %s29 = sshll.u32 %s1, 4
      %s30 = int_to_ptr.hbm [resolvable:$true] %s29
      %s31 = sshll.u32 [#allocation5], 4
      %s32 = int_to_ptr.vmem [resolvable:$true] %s31
      %37 = dma.hbm_to_vmem [thread:$0]  %s30, 512, %s32, [#allocation6], 128, 128, 8
    $region9: #{tpu_custom_call.1} parent=1 // pred_fallthru
      _
    // Predicated region
    $region10: #{tpu_custom_call.1} parent=1 // pred_check
      _
    $region11: #{tpu_custom_call.1} parent=1 // pred_check_branch
      %39 = sbr.rel (0) target = $region13
    $region12: #{tpu_custom_call.1} parent=1 // pred_region
      %41 = vsyncadd [#allocation6], 0
      %s42 = sshll.u32 %s2, 4
      %s43 = int_to_ptr.hbm [resolvable:$true] %s42
      %s44 = sshll.u32 [#allocation7], 4
      %s45 = int_to_ptr.vmem [resolvable:$true] %s44
      %50 = dma.hbm_to_vmem [thread:$0]  %s43, 1024, %s45, [#allocation6], 64, 64, 4
    $region13: #{tpu_custom_call.1} parent=1 // pred_fallthru
      _
    // Predicated region
    $region14: #{tpu_custom_call.1} parent=1 // pred_check
      _
    $region15: #{tpu_custom_call.1} parent=1 // pred_check_branch
      %52 = sbr.rel (0) target = $region17
    $region16: #{tpu_custom_call.1} parent=1 // pred_region
      %54 = vsyncadd [#allocation9], 0
      %s55 = sshll.u32 %s3, 4
      %s56 = int_to_ptr.hbm [resolvable:$true] %s55
      %s57 = sshll.u32 [#allocation8], 4
      %s58 = int_to_ptr.vmem [resolvable:$true] %s57
      %63 = dma.hbm_to_vmem [thread:$0]  %s56, 2048, %s58, [#allocation9], 128, 128, 8
    $region17: #{tpu_custom_call.1} parent=1 // pred_fallthru
      _
    // Predicated region
    $region18: #{tpu_custom_call.1} parent=1 // pred_check
      _
    $region19: #{tpu_custom_call.1} parent=1 // pred_check_branch
      %65 = sbr.rel (0) target = $region21
    $region20: #{tpu_custom_call.1} parent=1 // pred_region
      %67 = vsyncadd [#allocation9], 0
      %s68 = sshll.u32 %s4, 4
      %s69 = int_to_ptr.hbm [resolvable:$true] %s68
      %s70 = sshll.u32 [#allocation10], 4
      %s71 = int_to_ptr.vmem [resolvable:$true] %s70
      %76 = dma.hbm_to_vmem [thread:$0]  %s69, 1024, %s71, [#allocation9], 64, 64, 4
    $region21: #{tpu_custom_call.1} parent=1 // pred_fallthru
      _
    // Predicated region
    $region22: #{tpu_custom_call.1} parent=1 // pred_check
      _
    $region23: #{tpu_custom_call.1} parent=1 // pred_check_branch
      %78 = sbr.rel (0) target = $region25
    $region24: #{tpu_custom_call.1} parent=1 // pred_region
      %80 = dma.done [#allocation3], 32
    $region25: #{tpu_custom_call.1} parent=1 // pred_fallthru
      _
    // Predicated region
    $region26: #{tpu_custom_call.1} parent=1 // pred_check
      _
    $region27: #{tpu_custom_call.1} parent=1 // pred_check_branch
      %82 = sbr.rel (0) target = $region29
    $region28: #{tpu_custom_call.1} parent=1 // pred_region
      %84 = dma.done [#allocation6], 512
    $region29: #{tpu_custom_call.1} parent=1 // pred_fallthru
      _
    // Predicated region
    $region30: #{tpu_custom_call.1} parent=1 // pred_check
      _
    $region31: #{tpu_custom_call.1} parent=1 // pred_check_branch
      %86 = sbr.rel (0) target = $region33
    $region32: #{tpu_custom_call.1} parent=1 // pred_region
      %88 = dma.done [#allocation6], 1024
    $region33: #{tpu_custom_call.1} parent=1 // pred_fallthru
      _
    // Predicated region
    $region34: #{tpu_custom_call.1} parent=1 // pred_check
      _
    $region35: #{tpu_custom_call.1} parent=1 // pred_check_branch
      %90 = sbr.rel (0) target = $region37
    $region36: #{tpu_custom_call.1} parent=1 // pred_region
      %92 = dma.done [#allocation9], 2048
    $region37: #{tpu_custom_call.1} parent=1 // pred_fallthru
      _
    // Predicated region
    $region38: #{tpu_custom_call.1} parent=1 // pred_check
      _
    $region39: #{tpu_custom_call.1} parent=1 // pred_check_branch
      %94 = sbr.rel (0) target = $region41
    $region40: #{tpu_custom_call.1} parent=1 // pred_region
      %96 = dma.done [#allocation9], 1024
    $region41: #{tpu_custom_call.1} parent=1 // pred_fallthru
      _
    %v98 = vld [vmem:[#allocation2] sm:$0x3]
    %v99 = vpack.c.bf16 %v98, %v98
    %v100 = vld [vmem:[#allocation7] sm:$0xf]
    %v101 = vld [vmem:[#allocation7 + $0x4] sm:$0xf]
    %v102 = vld [vmem:[#allocation7 + $0x8] sm:$0xf]
    %v103 = vld [vmem:[#allocation7 + $0xc] sm:$0xf]
    %v104 = vld [vmem:[#allocation7 + $0x10] sm:$0xf]
    %v105 = vld [vmem:[#allocation7 + $0x14] sm:$0xf]
    %v106 = vld [vmem:[#allocation7 + $0x18] sm:$0xf]
    %v107 = vld [vmem:[#allocation7 + $0x1c] sm:$0xf]
    %v108 = vld [vmem:[#allocation7 + $0x20] sm:$0xf]
    %v109 = vld [vmem:[#allocation7 + $0x24] sm:$0xf]
    %v110 = vld [vmem:[#allocation7 + $0x28] sm:$0xf]
    %v111 = vld [vmem:[#allocation7 + $0x2c] sm:$0xf]
    %v112 = vld [vmem:[#allocation7 + $0x30] sm:$0xf]
    %v113 = vld [vmem:[#allocation7 + $0x34] sm:$0xf]
    %v114 = vld [vmem:[#allocation7 + $0x38] sm:$0xf]
    %v115 = vld [vmem:[#allocation7 + $0x3c] sm:$0xf]
    %v132 = vunpack.c.l.b16 %v100
    %v133 = vunpack.c.l.b16 %v101
    %v134 = vunpack.c.l.b16 %v102
    %v135 = vunpack.c.l.b16 %v103
    %v136 = vunpack.c.l.b16 %v104
    %v137 = vunpack.c.l.b16 %v105
    %v138 = vunpack.c.l.b16 %v106
    %v139 = vunpack.c.l.b16 %v107
    %v140 = vunpack.c.l.b16 %v108
    %v141 = vunpack.c.l.b16 %v109
    %v142 = vunpack.c.l.b16 %v110
    %v143 = vunpack.c.l.b16 %v111
    %v144 = vunpack.c.l.b16 %v112
    %v145 = vunpack.c.l.b16 %v113
    %v146 = vunpack.c.l.b16 %v114
    %v147 = vunpack.c.l.b16 %v115
    %v148 = vpack.c.b16 %v133, %v132
    %v149 = vpack.c.b16 %v135, %v134
    %v150 = vpack.c.b16 %v137, %v136
    %v151 = vpack.c.b16 %v139, %v138
    %v152 = vpack.c.b16 %v141, %v140
    %v153 = vpack.c.b16 %v143, %v142
    %v154 = vpack.c.b16 %v145, %v144
    %v155 = vpack.c.b16 %v147, %v146
    %164 = vmatpush.bf16.msra.mxu0 %v155
    %165 = vmatpush.bf16.msra.mxu0 %v154
    %166 = vmatpush.bf16.msra.mxu0 %v153
    %167 = vmatpush.bf16.msra.mxu0 %v152
    %168 = vmatpush.bf16.msra.mxu0 %v151
    %169 = vmatpush.bf16.msra.mxu0 %v150
    %170 = vmatpush.bf16.msra.mxu0 %v149
    %171 = vmatpush.bf16.msra.mxu0 %v148
    %172 = vmatmul.bf16.gmra.mxu0 %v99
    %v173 = vpop.f32.mrf.mxu0
    %v174 = vadd.f32 0.0, %v173
    %v175 = vpop.f32.mrf.mxu0
    %176 = vdwg.mxu0
    %v177 = vld [vmem:[#allocation5] sm:$0xff]
    %v178 = vld [vmem:[#allocation5 + $0x8] sm:$0xff]
    %v179 = vld [vmem:[#allocation5 + $0x10] sm:$0xff]
    %v180 = vld [vmem:[#allocation5 + $0x18] sm:$0xff]
    %v181 = vpack.c.bf16 %v178, %v177
    %v182 = vpack.c.bf16 %v180, %v179
    %v183 = vld [vmem:[#allocation8] sm:$0xff]
    %v184 = vld [vmem:[#allocation8 + $0x8] sm:$0xff]
    %v185 = vld [vmem:[#allocation8 + $0x10] sm:$0xff]
    %v186 = vld [vmem:[#allocation8 + $0x18] sm:$0xff]
    %v187 = vld [vmem:[#allocation8 + $0x20] sm:$0xff]
    %v188 = vld [vmem:[#allocation8 + $0x28] sm:$0xff]
    %v189 = vld [vmem:[#allocation8 + $0x30] sm:$0xff]
    %v190 = vld [vmem:[#allocation8 + $0x38] sm:$0xff]
    %v191 = vld [vmem:[#allocation8 + $0x40] sm:$0xff]
    %v192 = vld [vmem:[#allocation8 + $0x48] sm:$0xff]
    %v193 = vld [vmem:[#allocation8 + $0x50] sm:$0xff]
    %v194 = vld [vmem:[#allocation8 + $0x58] sm:$0xff]
    %v195 = vld [vmem:[#allocation8 + $0x60] sm:$0xff]
    %v196 = vld [vmem:[#allocation8 + $0x68] sm:$0xff]
    %v197 = vld [vmem:[#allocation8 + $0x70] sm:$0xff]
    %v198 = vld [vmem:[#allocation8 + $0x78] sm:$0xff]
    %v215 = vunpack.c.l.b16 %v183
    %v216 = vunpack.c.h.b16 %v183
    %v217 = vunpack.c.l.b16 %v184
    %v218 = vunpack.c.h.b16 %v184
    %v219 = vunpack.c.l.b16 %v185
    %v220 = vunpack.c.h.b16 %v185
    %v221 = vunpack.c.l.b16 %v186
    %v222 = vunpack.c.h.b16 %v186
    %v223 = vunpack.c.l.b16 %v187
    %v224 = vunpack.c.h.b16 %v187
    %v225 = vunpack.c.l.b16 %v188
    %v226 = vunpack.c.h.b16 %v188
    %v227 = vunpack.c.l.b16 %v189
    %v228 = vunpack.c.h.b16 %v189
    %v229 = vunpack.c.l.b16 %v190
    %v230 = vunpack.c.h.b16 %v190
    %v231 = vunpack.c.l.b16 %v191
    %v232 = vunpack.c.h.b16 %v191
    %v233 = vunpack.c.l.b16 %v192
    %v234 = vunpack.c.h.b16 %v192
    %v235 = vunpack.c.l.b16 %v193
    %v236 = vunpack.c.h.b16 %v193
    %v237 = vunpack.c.l.b16 %v194
    %v238 = vunpack.c.h.b16 %v194
    %v239 = vunpack.c.l.b16 %v195
    %v240 = vunpack.c.h.b16 %v195
    %v241 = vunpack.c.l.b16 %v196
    %v242 = vunpack.c.h.b16 %v196
    %v243 = vunpack.c.l.b16 %v197
    %v244 = vunpack.c.h.b16 %v197
    %v245 = vunpack.c.l.b16 %v198
    %v246 = vunpack.c.h.b16 %v198
    %v247 = vpack.c.b16 %v217, %v215
    %v248 = vpack.c.b16 %v218, %v216
    %v249 = vpack.c.b16 %v221, %v219
    %v250 = vpack.c.b16 %v222, %v220
    %v251 = vpack.c.b16 %v225, %v223
    %v252 = vpack.c.b16 %v226, %v224
    %v253 = vpack.c.b16 %v229, %v227
    %v254 = vpack.c.b16 %v230, %v228
    %v255 = vpack.c.b16 %v233, %v231
    %v256 = vpack.c.b16 %v234, %v232
    %v257 = vpack.c.b16 %v237, %v235
    %v258 = vpack.c.b16 %v238, %v236
    %v259 = vpack.c.b16 %v241, %v239
    %v260 = vpack.c.b16 %v242, %v240
    %v261 = vpack.c.b16 %v245, %v243
    %v262 = vpack.c.b16 %v246, %v244
    %279 = vmatpush.bf16.msra.mxu0 %v261
    %280 = vmatpush.bf16.msra.mxu0 %v259
    %281 = vmatpush.bf16.msra.mxu0 %v257
    %282 = vmatpush.bf16.msra.mxu0 %v255
    %283 = vmatpush.bf16.msra.mxu0 %v253
    %284 = vmatpush.bf16.msra.mxu0 %v251
    %285 = vmatpush.bf16.msra.mxu0 %v249
    %286 = vmatpush.bf16.msra.mxu0 %v247
    %287 = vmatmul.bf16.gmra.mxu0 %v181
    %v288 = vpop.f32.mrf.mxu0
    %v289 = vadd.f32 0.0, %v288
    %v290 = vpop.f32.mrf.mxu0
    %v291 = vadd.f32 0.0, %v290
    %292 = vmatmul.bf16.gmra.mxu0 %v182
    %v293 = vpop.f32.mrf.mxu0
    %v294 = vadd.f32 0.0, %v293
    %v295 = vpop.f32.mrf.mxu0
    %v296 = vadd.f32 0.0, %v295
    %297 = vdwg.mxu0
    %298 = vmatpush.bf16.msra.mxu0 %v262
    %299 = vmatpush.bf16.msra.mxu0 %v260
    %300 = vmatpush.bf16.msra.mxu0 %v258
    %301 = vmatpush.bf16.msra.mxu0 %v256
    %302 = vmatpush.bf16.msra.mxu0 %v254
    %303 = vmatpush.bf16.msra.mxu0 %v252
    %304 = vmatpush.bf16.msra.mxu0 %v250
    %305 = vmatpush.bf16.msra.mxu0 %v248
    %306 = vmatmul.bf16.gmra.mxu0 %v181
    %v307 = vpop.f32.mrf.mxu0
    %v308 = vadd.f32 0.0, %v307
    %v309 = vpop.f32.mrf.mxu0
    %v310 = vadd.f32 0.0, %v309
    %311 = vmatmul.bf16.gmra.mxu0 %v182
    %v312 = vpop.f32.mrf.mxu0
    %v313 = vadd.f32 0.0, %v312
    %v314 = vpop.f32.mrf.mxu0
    %v315 = vadd.f32 0.0, %v314
    %316 = vdwg.mxu0
    %v317 = vpack.c.bf16 %v174, %v174
    %v318 = vpack.c.bf16 %v291, %v289
    %v319 = vpack.c.bf16 %v296, %v294
    %320 = vmatpush.bf16.xpose.msra.mxu0 0
    %321 = vmatpush.bf16.xpose.msra.mxu0 0
    %322 = vmatpush.bf16.xpose.msra.mxu0 0
    %323 = vmatpush.bf16.xpose.msra.mxu0 0
    %324 = vmatpush.bf16.xpose.msra.mxu0 0
    %325 = vmatpush.bf16.xpose.msra.mxu0 0
    %326 = vmatpush.bf16.xpose.msra.mxu0 %v319
    %327 = vmatpush.bf16.xpose.msra.mxu0 %v318
    %328 = vmatmul.bf16.gmra.mxu0 %v317
    %v329 = vpop.f32.mrf.mxu0
    %v330 = vadd.f32 0.0, %v329
    %v331 = vpop.f32.mrf.mxu0
    %332 = vdwg.mxu0
    %v333 = vmul.f32 %v330, 0.088388346
    %v334 = vlaneseq
    %v335 = vshrl.u32 %v334, 7
    %v336 = vlaneseq
    %v337 = vand.u32 %v336, 127
    %v338 = vmul.u32 %v335, 16
    %vm339 = vcmp.ge.s32.totalorder %v337, %v338
    %v340 = vadd.s32 %v335, 1
    %v341 = vmul.u32 %v340, 16
    %vm342 = vcmp.lt.s32.totalorder %v337, %v341
    %vm343 = vmand %vm339, %vm342
    %v344 = vsel %vm343, %v333, -1e+30
    %vm345 = vcmask 254976
    %v346 = vsel %vm345, %v344, -inf
    %347 = vmax.xlane.f32.xlu0 %v346
    %v348 = vpop.xlane.xlu0 %347
    %v349 = vsub.f32 %v344, %v348
    %v350 = vmul.f32 %v349, 1.442695
    %v351 = vpow.pop %v350
    %v352 = vsel %vm345, %v351, 0.0
    %353 = vadd.xlane.f32.xlu0 %v352
    %v354 = vpop.xlane.xlu0 %353
    %v355 = vrcp.pop %v354
    %v356 = vmul.f32 %v351, %v355
    %v357 = vpack.c.bf16 %v356, %v356
    %v358 = vpack.c.bf16 %v310, %v308
    %v359 = vpack.c.bf16 %v315, %v313
    %vm360 = vcmask 261120
    %v362 = vsel %vm360, %v357, 0
    %364 = vmatpush.bf16.msra.mxu0 0
    %365 = vmatpush.bf16.msra.mxu0 0
    %366 = vmatpush.bf16.msra.mxu0 0
    %367 = vmatpush.bf16.msra.mxu0 0
    %368 = vmatpush.bf16.msra.mxu0 0
    %369 = vmatpush.bf16.msra.mxu0 0
    %370 = vmatpush.bf16.msra.mxu0 %v359
    %371 = vmatpush.bf16.msra.mxu0 %v358
    %372 = vmatmul.bf16.gmra.mxu0 %v362
    %v373 = vpop.f32.mrf.mxu0
    %v374 = vadd.f32 0.0, %v373
    %v375 = vpop.f32.mrf.mxu0
    %376 = vdwg.mxu0
    %v377 = vpack.c.bf16 %v374, %v374
    %v378 = vld [vmem:[#allocation10] sm:$0xf]
    %v379 = vld [vmem:[#allocation10 + $0x4] sm:$0xf]
    %v380 = vld [vmem:[#allocation10 + $0x8] sm:$0xf]
    %v381 = vld [vmem:[#allocation10 + $0xc] sm:$0xf]
    %v382 = vld [vmem:[#allocation10 + $0x10] sm:$0xf]
    %v383 = vld [vmem:[#allocation10 + $0x14] sm:$0xf]
    %v384 = vld [vmem:[#allocation10 + $0x18] sm:$0xf]
    %v385 = vld [vmem:[#allocation10 + $0x1c] sm:$0xf]
    %v386 = vld [vmem:[#allocation10 + $0x20] sm:$0xf]
    %v387 = vld [vmem:[#allocation10 + $0x24] sm:$0xf]
    %v388 = vld [vmem:[#allocation10 + $0x28] sm:$0xf]
    %v389 = vld [vmem:[#allocation10 + $0x2c] sm:$0xf]
    %v390 = vld [vmem:[#allocation10 + $0x30] sm:$0xf]
    %v391 = vld [vmem:[#allocation10 + $0x34] sm:$0xf]
    %v392 = vld [vmem:[#allocation10 + $0x38] sm:$0xf]
    %v393 = vld [vmem:[#allocation10 + $0x3c] sm:$0xf]
    %v410 = vunpack.c.l.b16 %v378
    %v411 = vunpack.c.l.b16 %v379
    %v412 = vunpack.c.l.b16 %v380
    %v413 = vunpack.c.l.b16 %v381
    %v414 = vunpack.c.l.b16 %v382
    %v415 = vunpack.c.l.b16 %v383
    %v416 = vunpack.c.l.b16 %v384
    %v417 = vunpack.c.l.b16 %v385
    %v418 = vunpack.c.l.b16 %v386
    %v419 = vunpack.c.l.b16 %v387
    %v420 = vunpack.c.l.b16 %v388
    %v421 = vunpack.c.l.b16 %v389
    %v422 = vunpack.c.l.b16 %v390
    %v423 = vunpack.c.l.b16 %v391
    %v424 = vunpack.c.l.b16 %v392
    %v425 = vunpack.c.l.b16 %v393
    %v426 = vpack.c.b16 %v411, %v410
    %v427 = vpack.c.b16 %v413, %v412
    %v428 = vpack.c.b16 %v415, %v414
    %v429 = vpack.c.b16 %v417, %v416
    %v430 = vpack.c.b16 %v419, %v418
    %v431 = vpack.c.b16 %v421, %v420
    %v432 = vpack.c.b16 %v423, %v422
    %v433 = vpack.c.b16 %v425, %v424
    %442 = vmatpush.bf16.msra.mxu0 %v433
    %443 = vmatpush.bf16.msra.mxu0 %v432
    %444 = vmatpush.bf16.msra.mxu0 %v431
    %445 = vmatpush.bf16.msra.mxu0 %v430
    %446 = vmatpush.bf16.msra.mxu0 %v429
    %447 = vmatpush.bf16.msra.mxu0 %v428
    %448 = vmatpush.bf16.msra.mxu0 %v427
    %449 = vmatpush.bf16.msra.mxu0 %v426
    %450 = vmatmul.bf16.gmra.mxu0 %v377
    %v451 = vpop.f32.mrf.mxu0
    %v452 = vadd.f32 0.0, %v451
    %v453 = vpop.f32.mrf.mxu0
    %454 = vdwg.mxu0
    %455 = vst [vmem:[#allocation11] sm:$0x3] %v452
    // Predicated region
    $region42: #{tpu_custom_call.1} parent=1 // pred_check
      _
    $region43: #{tpu_custom_call.1} parent=1 // pred_check_branch
      %457 = sbr.rel (0) target = $region45
    $region44: #{tpu_custom_call.1} parent=1 // pred_region
      %459 = vsyncadd [#allocation4], 0
      %s461 = sshll.u32 [#allocation11], 4
      %s462 = int_to_ptr.vmem [resolvable:$true] %s461
      %s463 = sshll.u32 %s5, 4
      %s464 = int_to_ptr.hbm [resolvable:$true] %s463
      %466 = dma.vmem_to_hbm [thread:$0]  %s462, 32, %s464, [#allocation4]
    $region45: #{tpu_custom_call.1} parent=1 // pred_fallthru
      _
    // Predicated region
    $region46: #{tpu_custom_call.1} parent=1 // pred_check
      _
    $region47: #{tpu_custom_call.1} parent=1 // pred_check_branch
      %468 = sbr.rel (0) target = $region49
    $region48: #{tpu_custom_call.1} parent=1 // pred_region
      %470 = dma.done [#allocation4], 32
    $region49: #{tpu_custom_call.1} parent=1 // pred_fallthru
      _
    %471 = vsyncpa [#allocation3], 1
    %472 = vsyncpa [#allocation6], 1
    %473 = vsyncpa [#allocation9], 1
    %474 = vsyncpa [#allocation4], 1

</llo_original>
